<compile_context>
chip_gen: v6e
topology: v6e:2x2x1
jax: 0.10.0
libtpu: 0.0.40
codegen_flags: <defaults>
</compile_context>

<pallas_src>
import functools

import jax
import jax.numpy as jnp
from jax.experimental import pallas as pl
from jax.experimental.pallas import tpu as pltpu


def _round_up(x: int, m: int) -> int:
    return ((x + m - 1) // m) * m


def mlp_kernel(x_ref, w1_ref, b1_ref, w2_ref, b2_ref, o_ref):
    # x_ref : [2, TB]   (feature-major: batch on lanes)
    # w1_ref: [50, 2]   (== fc1.weight, PyTorch layout)
    # b1_ref: [50, 1]
    # w2_ref: [2, 50]   (== fc2.weight)
    # b2_ref: [2, 1]
    # o_ref : [2, TB]
    # fc1 on the MXU: [50,2] @ [2,TB] -> [50,TB]; only bias + ReLU on the VPU.
    h = jnp.dot(w1_ref[...], x_ref[...], preferred_element_type=jnp.float32)
    h = jnp.maximum(h + b1_ref[...], 0.0)
    # fc2 on the MXU: [2,50] @ [50,TB] -> lane-dense [2,TB].
    y = jnp.dot(w2_ref[...], h, preferred_element_type=jnp.float32)
    o_ref[...] = jnp.maximum(y + b2_ref[...], 0.0).astype(o_ref.dtype)


@functools.partial(jax.jit, static_argnames=("max_tb",))
def net_forward(x, w1, b1, w2, b2, *, max_tb=16384):
    """Pallas forward for Net: fc1 -> relu -> fc2 -> relu.

    x:  [B, 2]  float32 (PyTorch nn.Linear input convention)
    w1: [50, 2] float32 (== fc1.weight)
    b1: [50]    float32 (== fc1.bias)
    w2: [2, 50] float32 (== fc2.weight)
    b2: [2]     float32 (== fc2.bias)
    returns [B, 2] float32
    """
    B = x.shape[0]
    # Guard: the lane-block width must be a multiple of 128.
    max_tb = max(128, _round_up(int(max_tb), 128))
    # Pad only up to the next multiple of 128 (NOT to a multiple of the tile);
    # a ragged trailing block is handled by Pallas' partial-block machinery.
    Bp = _round_up(B, 128)
    TB = min(max_tb, Bp)
    grid = (pl.cdiv(Bp, TB),)

    # Feature-major view of the batch (batch on lanes).  With
    # allow_input_fusion below, XLA may fuse this producer into the operand.
    xt = jnp.pad(x.T, ((0, 0), (0, Bp - B)))          # [2, Bp]
    b1c = b1.reshape(50, 1)
    b2c = b2.reshape(2, 1)

    out_t = pl.pallas_call(
        mlp_kernel,
        out_shape=jax.ShapeDtypeStruct((2, Bp), jnp.float32),
        grid=grid,
        in_specs=[
            # Streamed, double-buffered batch tile.
            pl.BlockSpec((2, TB), lambda i: (0, i)),
            # Tiny weights/biases: constant index_map -> fetched once, resident.
            pl.BlockSpec((50, 2), lambda i: (0, 0)),
            pl.BlockSpec((50, 1), lambda i: (0, 0)),
            pl.BlockSpec((2, 50), lambda i: (0, 0)),
            pl.BlockSpec((2, 1), lambda i: (0, 0)),
        ],
        out_specs=pl.BlockSpec((2, TB), lambda i: (0, i)),
        compiler_params=pltpu.CompilerParams(
            dimension_semantics=("parallel",),   # batch tiles are independent
            vmem_limit_bytes=48 * 1024 * 1024,   # headroom for the big tile,
                                                 # still < v7x 64 MiB physical
            # Allow the transpose/pad producer of x to fuse into the operand
            # instead of doing an extra HBM round trip.
            allow_input_fusion=[True, False, False, False, False],
        ),
    )(xt, w1, b1c, w2, b2c)

    return out_t[:, :B].T                              # back to [B, 2]


def init_params(key):
    """Deterministic init mimicking PyTorch nn.Linear default U(-1/sqrt(fan_in), +)."""
    k1, k2, k3, k4 = jax.random.split(key, 4)
    bound1 = 1.0 / jnp.sqrt(2.0)    # fc1 fan_in = 2
    bound2 = 1.0 / jnp.sqrt(50.0)   # fc2 fan_in = 50
    w1 = jax.random.uniform(k1, (50, 2), jnp.float32, -bound1, bound1)
    b1 = jax.random.uniform(k2, (50,), jnp.float32, -bound1, bound1)
    w2 = jax.random.uniform(k3, (2, 50), jnp.float32, -bound2, bound2)
    b2 = jax.random.uniform(k4, (2,), jnp.float32, -bound2, bound2)
    return w1, b1, w2, b2


def reference_forward(x, w1, b1, w2, b2):
    h = jnp.maximum(x @ w1.T + b1, 0.0)
    return jnp.maximum(h @ w2.T + b2, 0.0)


if __name__ == "__main__":
    key = jax.random.PRNGKey(0)
    w1, b1, w2, b2 = init_params(key)

    # XOR-style inputs, batch=4, 2 features (single, partially filled tile).
    x_small = jnp.array([[0.0, 0.0],
                         [0.0, 1.0],
                         [1.0, 0.0],
                         [1.0, 1.0]], dtype=jnp.float32)
    out_small = net_forward(x_small, w1, b1, w2, b2)
    jax.block_until_ready(out_small)
    ref_small = reference_forward(x_small, w1, b1, w2, b2)
    assert out_small.shape == (4, 2)
    assert jnp.allclose(out_small, ref_small, atol=1e-4, rtol=1e-4)

    # Ragged batch: multiple grid steps + a partial trailing block
    # (Bp=384, TB=256 -> grid=2, second block overruns the array by 128 lanes).
    x_mid = jax.random.normal(jax.random.PRNGKey(1), (333, 2), jnp.float32)
    out_mid = net_forward(x_mid, w1, b1, w2, b2, max_tb=256)
    jax.block_until_ready(out_mid)
    ref_mid = reference_forward(x_mid, w1, b1, w2, b2)
    assert out_mid.shape == (333, 2)
    assert jnp.allclose(out_mid, ref_mid, atol=1e-4, rtol=1e-4)

    # Larger ragged batch at the default 16K tile: exercises the big-tile path
    # (Bp=40064, TB=16384 -> grid=3, partial trailing block).
    x_big = jax.random.normal(jax.random.PRNGKey(2), (40_000, 2), jnp.float32)
    out_big = net_forward(x_big, w1, b1, w2, b2)
    jax.block_until_ready(out_big)
    ref_big = reference_forward(x_big, w1, b1, w2, b2)
    assert out_big.shape == (40_000, 2)
    assert jnp.allclose(out_big, ref_big, atol=1e-4, rtol=1e-4)

    print("KERNEL_OK")
</pallas_src>

<mosaic_0001>
module attributes {stable_mosaic.version = 11 : i64} {
  func.func @mlp_kernel(%arg0: i32, %arg1: memref<2x128xf32, #tpu.memory_space<vmem>>, %arg2: memref<50x2xf32, #tpu.memory_space<vmem>>, %arg3: memref<50x1xf32, #tpu.memory_space<vmem>>, %arg4: memref<2x50xf32, #tpu.memory_space<vmem>>, %arg5: memref<2x1xf32, #tpu.memory_space<vmem>>, %arg6: memref<2x128xf32, #tpu.memory_space<vmem>>) attributes {dimension_semantics = [#tpu.dimension_semantics<parallel>], iteration_bounds = array<i64: 1>, scalar_prefetch = 0 : i64, scratch_operands = 0 : i64, tpu.core_type = #tpu.core_type<tc>, window_params = [{transform_indices = @transform_0, window_bounds = array<i64: 2, 128>}, {pipeline_mode = #tpu.pipeline_mode<synchronous>, transform_indices = @transform_1, window_bounds = array<i64: 50, 2>}, {pipeline_mode = #tpu.pipeline_mode<synchronous>, transform_indices = @transform_2, window_bounds = array<i64: 50, 1>}, {pipeline_mode = #tpu.pipeline_mode<synchronous>, transform_indices = @transform_3, window_bounds = array<i64: 2, 50>}, {pipeline_mode = #tpu.pipeline_mode<synchronous>, transform_indices = @transform_4, window_bounds = array<i64: 2, 1>}, {transform_indices = @transform_5, window_bounds = array<i64: 2, 128>}]} {
    %c0 = arith.constant 0 : index
    %c0_0 = arith.constant 0 : index
    %0 = vector.load %arg2[%c0, %c0_0] : memref<50x2xf32, #tpu.memory_space<vmem>>, vector<50x2xf32>
    %c0_1 = arith.constant 0 : index
    %c0_2 = arith.constant 0 : index
    %1 = vector.load %arg1[%c0_1, %c0_2] : memref<2x128xf32, #tpu.memory_space<vmem>>, vector<2x128xf32>
    %cst = arith.constant dense<0.000000e+00> : vector<50x128xf32>
    %2 = tpu.matmul %0, %1, %cst {dimension_numbers = #tpu.dot_dimension_numbers<[1], [0], [0], [1], [0, 0, 1, 1], [], []>} : vector<50x2xf32>, vector<2x128xf32>, vector<50x128xf32> -> vector<50x128xf32>
    %c0_3 = arith.constant 0 : index
    %c0_4 = arith.constant 0 : index
    %3 = vector.load %arg3[%c0_3, %c0_4] : memref<50x1xf32, #tpu.memory_space<vmem>>, vector<50x1xf32>
    %4 = vector.broadcast %3 : vector<50x1xf32> to vector<50x128xf32>
    %5 = arith.addf %2, %4 : vector<50x128xf32>
    %cst_5 = arith.constant 0.000000e+00 : f32
    %6 = vector.broadcast %cst_5 : f32 to vector<50x128xf32>
    %7 = arith.maximumf %5, %6 : vector<50x128xf32>
    %c0_6 = arith.constant 0 : index
    %c0_7 = arith.constant 0 : index
    %8 = vector.load %arg4[%c0_6, %c0_7] : memref<2x50xf32, #tpu.memory_space<vmem>>, vector<2x50xf32>
    %cst_8 = arith.constant dense<0.000000e+00> : vector<2x128xf32>
    %9 = tpu.matmul %8, %7, %cst_8 {dimension_numbers = #tpu.dot_dimension_numbers<[1], [0], [0], [1], [0, 0, 1, 1], [], []>} : vector<2x50xf32>, vector<50x128xf32>, vector<2x128xf32> -> vector<2x128xf32>
    %c0_9 = arith.constant 0 : index
    %c0_10 = arith.constant 0 : index
    %10 = vector.load %arg5[%c0_9, %c0_10] : memref<2x1xf32, #tpu.memory_space<vmem>>, vector<2x1xf32>
    %11 = vector.broadcast %10 : vector<2x1xf32> to vector<2x128xf32>
    %12 = arith.addf %9, %11 : vector<2x128xf32>
    %cst_11 = arith.constant 0.000000e+00 : f32
    %13 = vector.broadcast %cst_11 : f32 to vector<2x128xf32>
    %14 = arith.maximumf %12, %13 : vector<2x128xf32>
    %c0_12 = arith.constant 0 : index
    %c0_13 = arith.constant 0 : index
    %15 = vector.load %arg6[%c0_12, %c0_13] : memref<2x128xf32, #tpu.memory_space<vmem>>, vector<2x128xf32>
    tpu.vector_store %arg6[%c0_12, %c0_13], %14 {strides = array<i32>} : memref<2x128xf32, #tpu.memory_space<vmem>>, vector<2x128xf32>,
    return
  }
  func.func @transform_0(%arg0: i32) -> (i32, i32) {
    %c0_i32 = arith.constant 0 : i32
    %c0_i32_0 = arith.constant 0 : i32
    return %c0_i32, %arg0 : i32, i32
  }
  func.func @transform_1(%arg0: i32) -> (i32, i32) {
    %c0_i32 = arith.constant 0 : i32
    %c0_i32_0 = arith.constant 0 : i32
    %c0_i32_1 = arith.constant 0 : i32
    return %c0_i32, %c0_i32_0 : i32, i32
  }
  func.func @transform_2(%arg0: i32) -> (i32, i32) {
    %c0_i32 = arith.constant 0 : i32
    %c0_i32_0 = arith.constant 0 : i32
    %c0_i32_1 = arith.constant 0 : i32
    return %c0_i32, %c0_i32_0 : i32, i32
  }
  func.func @transform_3(%arg0: i32) -> (i32, i32) {
    %c0_i32 = arith.constant 0 : i32
    %c0_i32_0 = arith.constant 0 : i32
    %c0_i32_1 = arith.constant 0 : i32
    return %c0_i32, %c0_i32_0 : i32, i32
  }
  func.func @transform_4(%arg0: i32) -> (i32, i32) {
    %c0_i32 = arith.constant 0 : i32
    %c0_i32_0 = arith.constant 0 : i32
    %c0_i32_1 = arith.constant 0 : i32
    return %c0_i32, %c0_i32_0 : i32, i32
  }
  func.func @transform_5(%arg0: i32) -> (i32, i32) {
    %c0_i32 = arith.constant 0 : i32
    %c0_i32_0 = arith.constant 0 : i32
    return %c0_i32, %arg0 : i32, i32
  }
}

</mosaic_0001>

<llo_original>
// kernel: net_forward.2
$region0: #{net_forward.2}
  #allocation0 [shape = 'u32[]', space=smem, size = 0x4, offset = 0x4, fixed_abs, tag = 'smem constant byte address 0x4 - core index']
  #allocation1 [shape = 'u32[144,128]{1,0:T(1,128)}', space=vmem, size = 0x12000, scoped, tag = 'internal scratch']
  #allocation2 [shape = 'u32[2048]{0}', space=vmem, size = 0x2000, scoped, tag = 'scoped memory for net_forward.2']
  #allocation3 [shape = 'u32[2048]{0}', space=vmem, size = 0x2000, scoped, tag = 'scoped memory for net_forward.2']
  #allocation4 [shape = 'u32[2048]{0}', space=vmem, size = 0x2000, scoped, tag = 'scoped memory for net_forward.2']
  #allocation5 [shape = 'u32[2048]{0}', space=vmem, size = 0x2000, scoped, tag = 'scoped memory for net_forward.2']
  #allocation6 [shape = 'u32[2048]{0}', space=vmem, size = 0x2000, scoped, tag = 'scoped memory for net_forward.2']
  %s0 = inlined_call_operand.vmem [shape: f32[50,2], index: 0, kind: input, shape index: {}]
  %s1 = inlined_call_operand.vmem [shape: f32[50,1], index: 1, kind: input, shape index: {}]
  %s2 = inlined_call_operand.vmem [shape: f32[2,50], index: 2, kind: input, shape index: {}]
  %s3 = inlined_call_operand.vmem [shape: f32[2,1], index: 3, kind: input, shape index: {}]
  %s4 = inlined_call_operand.vmem [shape: f32[2,4], index: 4, kind: input, shape index: {}]
  %s5 = inlined_call_operand.<no memory space> [shape: f32[], index: 5, kind: input, shape index: {}]
  %s6 = inlined_call_operand.vmem [shape: f32[2,128], index: 6, kind: output, shape index: {}]
  %s7 = sld [smem:[#allocation0]]
  $region30: #{net_forward.2} parent=0
    _
  %s9 = ssub.s32 1, %s7
  %s10 = scalar_select 0, %s9, %s7
  %v11 = vstv %s5
  $region1: #{net_forward.2} parent=0
    #allocation7 [shape = 'u8[1024]{0}', space=vmem, size = 0x400, dematerialized = true, scoped, tag = 'FusionAdapter Buffer %fusion.1 = f32[2,128]{1,0:T(2,128)} fusion(%param_4.1, %param_5), kind=kLoop, calls=%fused_computation.1.clone, metadata={op_name="jit(net_forward)/jit(_pad)/pad" stack_frame_id=8}']
    // Predicated region
    $region2: #{net_forward.2} parent=1 // pred_check
      _
    $region3: #{net_forward.2} parent=1 // pred_check_branch
      %13 = sbr.rel (0) target = $region5
    $region4: #{net_forward.2} parent=1 // pred_region
      _
    $region5: #{net_forward.2} parent=1 // pred_fallthru
      _
    // Predicated region
    $region6: #{net_forward.2} parent=1 // pred_check
      _
    $region7: #{net_forward.2} parent=1 // pred_check_branch
      %15 = sbr.rel (0) target = $region9
    $region8: #{net_forward.2} parent=1 // pred_region
      _
    $region9: #{net_forward.2} parent=1 // pred_fallthru
      _
    // Predicated region
    $region10: #{net_forward.2} parent=1 // pred_check
      _
    $region11: #{net_forward.2} parent=1 // pred_check_branch
      %17 = sbr.rel (0) target = $region13
    $region12: #{net_forward.2} parent=1 // pred_region
      _
    $region13: #{net_forward.2} parent=1 // pred_fallthru
      _
    // Predicated region
    $region14: #{net_forward.2} parent=1 // pred_check
      _
    $region15: #{net_forward.2} parent=1 // pred_check_branch
      %19 = sbr.rel (0) target = $region17
    $region16: #{net_forward.2} parent=1 // pred_region
      _
    $region17: #{net_forward.2} parent=1 // pred_fallthru
      _
    // Predicated region
    $region18: #{net_forward.2} parent=1 // pred_check
      _
    $region19: #{net_forward.2} parent=1 // pred_check_branch
      %21 = sbr.rel (0) target = $region21
    $region20: #{net_forward.2} parent=1 // pred_region
      _
    $region21: #{net_forward.2} parent=1 // pred_fallthru
      _
    %v22 = vld [vmem:[%s4] sm:$0x3]
    %v23 = vlaneseq
    %v24 = vshrl.u32 %v23, 7
    %vm26 = vcmp.lt.s32.totalorder %v24, 2
    %v27 = vsel %vm26, %v22, %v11
    %v28 = vlaneseq
    %v29 = vand.u32 %v28, 127
    %vm31 = vcmp.lt.s32.totalorder %v29, 4
    %v32 = vsel %vm31, %v27, %v11
    %s34 = ssub.s32 4, 1
    %35 = vst [vmem:[#allocation7] sm:%s34] %v32
    %v36 = vld [vmem:[%s0] sm:$0xff]
    %v37 = vld [vmem:[%s0 + $0x8] sm:$0xff]
    %v38 = vld [vmem:[%s0 + $0x10] sm:$0xff]
    %v39 = vld [vmem:[%s0 + $0x18] sm:$0xff]
    %v40 = vld [vmem:[%s0 + $0x20] sm:$0xff]
    %v41 = vld [vmem:[%s0 + $0x28] sm:$0xff]
    %v42 = vld [vmem:[%s0 + $0x30] sm:$0x3]
    %v43 = vld [vmem:[#allocation7] sm:$0x3]
    %v44 = vld [vmem:[%s1] sm:$0xff]
    %v45 = vld [vmem:[%s1 + $0x8] sm:$0xff]
    %v46 = vld [vmem:[%s1 + $0x10] sm:$0xff]
    %v47 = vld [vmem:[%s1 + $0x18] sm:$0xff]
    %v48 = vld [vmem:[%s1 + $0x20] sm:$0xff]
    %v49 = vld [vmem:[%s1 + $0x28] sm:$0xff]
    %v50 = vld [vmem:[%s1 + $0x30] sm:$0x3]
    %52 = vset.pattern.permute.xlu0 0
    %53 = vperm.xlu0 %52, %v44
    %v54 = vpop.permute.xlu0 %53
    %57 = vset.pattern.permute.xlu0 0
    %58 = vperm.xlu0 %57, %v45
    %v59 = vpop.permute.xlu0 %58
    %62 = vset.pattern.permute.xlu0 0
    %63 = vperm.xlu0 %62, %v46
    %v64 = vpop.permute.xlu0 %63
    %67 = vset.pattern.permute.xlu0 0
    %68 = vperm.xlu0 %67, %v47
    %v69 = vpop.permute.xlu0 %68
    %72 = vset.pattern.permute.xlu0 0
    %73 = vperm.xlu0 %72, %v48
    %v74 = vpop.permute.xlu0 %73
    %77 = vset.pattern.permute.xlu0 0
    %78 = vperm.xlu0 %77, %v49
    %v79 = vpop.permute.xlu0 %78
    %82 = vset.pattern.permute.xlu0 0
    %83 = vperm.xlu0 %82, %v50
    %v84 = vpop.permute.xlu0 %83
    %vm86 = vcmask 15360
    %v88 = vsel %vm86, %v36, 0
    %v91 = vsel %vm86, %v37, 0
    %v94 = vsel %vm86, %v38, 0
    %v97 = vsel %vm86, %v39, 0
    %v100 = vsel %vm86, %v40, 0
    %v103 = vsel %vm86, %v41, 0
    %v106 = vsel %vm86, %v42, 0
    %vm108 = vcmask 1041408
    %v110 = vsel %vm108, %v43, 0
    %112 = vmatprep.subr.mxu0 0.0
    %113 = vmatpush1.msra.mxu0 0.0
    %114 = vmatprep.subr.mxu0 0.0
    %115 = vmatpush1.msra.mxu0 0.0
    %116 = vmatprep.subr.mxu0 0.0
    %117 = vmatpush1.msra.mxu0 0.0
    %118 = vmatprep.subr.mxu0 0.0
    %119 = vmatpush1.msra.mxu0 0.0
    %120 = vmatprep.subr.mxu0 0.0
    %121 = vmatpush1.msra.mxu0 0.0
    %122 = vmatprep.subr.mxu0 0.0
    %123 = vmatpush1.msra.mxu0 0.0
    %124 = vmatprep.subr.mxu0 0.0
    %125 = vmatpush1.msra.mxu0 0.0
    %126 = vmatprep.subr.mxu0 0.0
    %127 = vmatpush1.msra.mxu0 0.0
    %128 = vmatprep.subr.mxu0 0.0
    %129 = vmatpush1.msra.mxu0 0.0
    %130 = vmatprep.subr.mxu0 0.0
    %131 = vmatpush1.msra.mxu0 0.0
    %132 = vmatprep.subr.mxu0 0.0
    %133 = vmatpush1.msra.mxu0 0.0
    %134 = vmatprep.subr.mxu0 0.0
    %135 = vmatpush1.msra.mxu0 0.0
    %136 = vmatprep.subr.mxu0 0.0
    %137 = vmatpush1.msra.mxu0 0.0
    %138 = vmatprep.subr.mxu0 0.0
    %139 = vmatpush1.msra.mxu0 0.0
    %140 = vmatprep.subr.mxu0 0.0
    %141 = vmatpush1.msra.mxu0 0.0
    %142 = vmatprep.subr.mxu0 0.0
    %143 = vmatpush1.msra.mxu0 %v110
    %144 = vmatprep.subr.mxu0 0.0
    %145 = vmatpush2.msra.mxu0 0.0
    %146 = vmatprep.subr.mxu0 0.0
    %147 = vmatpush2.msra.mxu0 0.0
    %148 = vmatprep.subr.mxu0 0.0
    %149 = vmatpush2.msra.mxu0 0.0
    %150 = vmatprep.subr.mxu0 0.0
    %151 = vmatpush2.msra.mxu0 0.0
    %152 = vmatprep.subr.mxu0 0.0
    %153 = vmatpush2.msra.mxu0 0.0
    %154 = vmatprep.subr.mxu0 0.0
    %155 = vmatpush2.msra.mxu0 0.0
    %156 = vmatprep.subr.mxu0 0.0
    %157 = vmatpush2.msra.mxu0 0.0
    %158 = vmatprep.subr.mxu0 0.0
    %159 = vmatpush2.msra.mxu0 0.0
    %160 = vmatprep.subr.mxu0 0.0
    %161 = vmatpush2.msra.mxu0 0.0
    %162 = vmatprep.subr.mxu0 0.0
    %163 = vmatpush2.msra.mxu0 0.0
    %164 = vmatprep.subr.mxu0 0.0
    %165 = vmatpush2.msra.mxu0 0.0
    %166 = vmatprep.subr.mxu0 0.0
    %167 = vmatpush2.msra.mxu0 0.0
    %168 = vmatprep.subr.mxu0 0.0
    %169 = vmatpush2.msra.mxu0 0.0
    %170 = vmatprep.subr.mxu0 0.0
    %171 = vmatpush2.msra.mxu0 0.0
    %172 = vmatprep.subr.mxu0 0.0
    %173 = vmatpush2.msra.mxu0 0.0
    %174 = vmatprep.subr.mxu0 0.0
    %175 = vmatpush2.msra.mxu0 0.0
    %176 = vmatprep.mubr.f32.mxu0 0.0
    %177 = vmatmul.mubr.f32.gmra.mxu0 %v88
    %v178 = vpop.f32.mrf.mxu0
    %v179 = vadd.f32 %v54, %v178
    %v180 = vpop.f32.mrf.mxu0
    %181 = vmatprep.mubr.f32.mxu0 0.0
    %182 = vmatmul.mubr.f32.gmra.mxu0 %v91
    %v183 = vpop.f32.mrf.mxu0
    %v184 = vadd.f32 %v59, %v183
    %v185 = vpop.f32.mrf.mxu0
    %186 = vmatprep.mubr.f32.mxu0 0.0
    %187 = vmatmul.mubr.f32.gmra.mxu0 %v94
    %v188 = vpop.f32.mrf.mxu0
    %v189 = vadd.f32 %v64, %v188
    %v190 = vpop.f32.mrf.mxu0
    %191 = vmatprep.mubr.f32.mxu0 0.0
    %192 = vmatmul.mubr.f32.gmra.mxu0 %v97
    %v193 = vpop.f32.mrf.mxu0
    %v194 = vadd.f32 %v69, %v193
    %v195 = vpop.f32.mrf.mxu0
    %196 = vmatprep.mubr.f32.mxu0 0.0
    %197 = vmatmul.mubr.f32.gmra.mxu0 %v100
    %v198 = vpop.f32.mrf.mxu0
    %v199 = vadd.f32 %v74, %v198
    %v200 = vpop.f32.mrf.mxu0
    %201 = vmatprep.mubr.f32.mxu0 0.0
    %202 = vmatmul.mubr.f32.gmra.mxu0 %v103
    %v203 = vpop.f32.mrf.mxu0
    %v204 = vadd.f32 %v79, %v203
    %v205 = vpop.f32.mrf.mxu0
    %206 = vmatprep.mubr.f32.mxu0 0.0
    %207 = vmatmul.mubr.f32.gmra.mxu0 %v106
    %v208 = vpop.f32.mrf.mxu0
    %v209 = vadd.f32 %v84, %v208
    %v210 = vpop.f32.mrf.mxu0
    %211 = vdwg.mxu0
    %v212 = vmax.f32 %v179, 0.0
    %v213 = vmax.f32 %v184, 0.0
    %v214 = vmax.f32 %v189, 0.0
    %v215 = vmax.f32 %v194, 0.0
    %v216 = vmax.f32 %v199, 0.0
    %v217 = vmax.f32 %v204, 0.0
    %v218 = vmax.f32 %v209, 0.0
    %v219 = vld [vmem:[%s2] sm:$0x3]
    %v220 = vld [vmem:[%s3] sm:$0x3]
    %222 = vset.pattern.permute.xlu0 0
    %223 = vperm.xlu0 %222, %v220
    %v224 = vpop.permute.xlu0 %223
    %vm226 = vcmask 408576
    %v228 = vsel %vm226, %v219, 0
    %v231 = vsel %vm108, %v218, 0
    %233 = vmatprep.subr.mxu0 0.0
    %234 = vmatpush1.msra.mxu0 0.0
    %235 = vmatprep.subr.mxu0 0.0
    %236 = vmatpush1.msra.mxu0 0.0
    %237 = vmatprep.subr.mxu0 0.0
    %238 = vmatpush1.msra.mxu0 0.0
    %239 = vmatprep.subr.mxu0 0.0
    %240 = vmatpush1.msra.mxu0 0.0
    %241 = vmatprep.subr.mxu0 0.0
    %242 = vmatpush1.msra.mxu0 0.0
    %243 = vmatprep.subr.mxu0 0.0
    %244 = vmatpush1.msra.mxu0 0.0
    %245 = vmatprep.subr.mxu0 0.0
    %246 = vmatpush1.msra.mxu0 0.0
    %247 = vmatprep.subr.mxu0 0.0
    %248 = vmatpush1.msra.mxu0 0.0
    %249 = vmatprep.subr.mxu0 0.0
    %250 = vmatpush1.msra.mxu0 0.0
    %251 = vmatprep.subr.mxu0 0.0
    %252 = vmatpush1.msra.mxu0 %v231
    %253 = vmatprep.subr.mxu0 0.0
    %254 = vmatpush1.msra.mxu0 %v217
    %255 = vmatprep.subr.mxu0 0.0
    %256 = vmatpush1.msra.mxu0 %v216
    %257 = vmatprep.subr.mxu0 0.0
    %258 = vmatpush1.msra.mxu0 %v215
    %259 = vmatprep.subr.mxu0 0.0
    %260 = vmatpush1.msra.mxu0 %v214
    %261 = vmatprep.subr.mxu0 0.0
    %262 = vmatpush1.msra.mxu0 %v213
    %263 = vmatprep.subr.mxu0 0.0
    %264 = vmatpush1.msra.mxu0 %v212
    %265 = vmatprep.subr.mxu0 0.0
    %266 = vmatpush2.msra.mxu0 0.0
    %267 = vmatprep.subr.mxu0 0.0
    %268 = vmatpush2.msra.mxu0 0.0
    %269 = vmatprep.subr.mxu0 0.0
    %270 = vmatpush2.msra.mxu0 0.0
    %271 = vmatprep.subr.mxu0 0.0
    %272 = vmatpush2.msra.mxu0 0.0
    %273 = vmatprep.subr.mxu0 0.0
    %274 = vmatpush2.msra.mxu0 0.0
    %275 = vmatprep.subr.mxu0 0.0
    %276 = vmatpush2.msra.mxu0 0.0
    %277 = vmatprep.subr.mxu0 0.0
    %278 = vmatpush2.msra.mxu0 0.0
    %279 = vmatprep.subr.mxu0 0.0
    %280 = vmatpush2.msra.mxu0 0.0
    %281 = vmatprep.subr.mxu0 0.0
    %282 = vmatpush2.msra.mxu0 0.0
    %283 = vmatprep.subr.mxu0 0.0
    %284 = vmatpush2.msra.mxu0 0.0
    %285 = vmatprep.subr.mxu0 0.0
    %286 = vmatpush2.msra.mxu0 0.0
    %287 = vmatprep.subr.mxu0 0.0
    %288 = vmatpush2.msra.mxu0 0.0
    %289 = vmatprep.subr.mxu0 0.0
    %290 = vmatpush2.msra.mxu0 0.0
    %291 = vmatprep.subr.mxu0 0.0
    %292 = vmatpush2.msra.mxu0 0.0
    %293 = vmatprep.subr.mxu0 0.0
    %294 = vmatpush2.msra.mxu0 0.0
    %295 = vmatprep.subr.mxu0 0.0
    %296 = vmatpush2.msra.mxu0 0.0
    %297 = vmatprep.mubr.f32.mxu0 0.0
    %298 = vmatmul.mubr.f32.gmra.mxu0 %v228
    %v299 = vpop.f32.mrf.mxu0
    %v300 = vadd.f32 %v224, %v299
    %v301 = vpop.f32.mrf.mxu0
    %302 = vdwg.mxu0
    %v303 = vmax.f32 %v300, 0.0
    %304 = vst [vmem:[%s6] sm:$0x3] %v303
    // Predicated region
    $region22: #{net_forward.2} parent=1 // pred_check
      _
    $region23: #{net_forward.2} parent=1 // pred_check_branch
      %306 = sbr.rel (0) target = $region25
    $region24: #{net_forward.2} parent=1 // pred_region
      _
    $region25: #{net_forward.2} parent=1 // pred_fallthru
      _
    // Predicated region
    $region26: #{net_forward.2} parent=1 // pred_check
      _
    $region27: #{net_forward.2} parent=1 // pred_check_branch
      %308 = sbr.rel (0) target = $region29
    $region28: #{net_forward.2} parent=1 // pred_region
      _
    $region29: #{net_forward.2} parent=1 // pred_fallthru
      _

</llo_original>
